<compile_context>
chip_gen: v7x
topology: tpu7x:2x2x1
jax: 0.10.0
libtpu: 0.0.40
codegen_flags: <defaults>
</compile_context>

<pallas_src>
import jax
import jax.numpy as jnp
from jax.experimental import pallas as pl
from jax.experimental.pallas import tpu as pltpu


def _patch_nconv_kernel(x_ref, a_ref, o_ref):
    # x_ref: (1, TC, W, TP)   lanes = P-tile, second-minor = W
    # a_ref: (1, V,  W, TP)   lanes = P-tile, second-minor = W
    # o_ref: (1, TC, V, TP)   lanes = P-tile, second-minor = V
    W = x_ref.shape[2]
    acc = None
    # Statically unrolled VPU multiply-accumulate over the (small) W axis.
    # Broadcasts stay per-vreg (stride-0 sublane reads), nothing is staged
    # through VMEM beyond the single f32 accumulator.
    for w in range(W):
        xw = x_ref[0, :, w, :].astype(jnp.float32)      # (TC, TP)
        aw = a_ref[0, :, w, :].astype(jnp.float32)      # (V,  TP)
        term = xw[:, None, :] * aw[None, :, :]          # (TC, V, TP)
        acc = term if acc is None else acc + term
    o_ref[0] = acc.astype(o_ref.dtype)


def _vmem_info():
    """(physical VMEM bytes, block budget) -- generation-aware."""
    try:
        cap = int(pltpu.get_tpu_info().vmem_capacity_bytes)
    except Exception:  # CPU interpret / unknown backend
        cap = 64 << 20
    # Keep total usage (2x double-buffered blocks + f32 acc + Mosaic
    # temporaries) well under physical VMEM:
    #   v5e / v6e: 128 MiB physical -> ~40 MiB budget
    #   v7x:        64 MiB physical -> ~22 MiB budget
    budget = max(12 << 20, min(int(cap * 0.35), 40 << 20))
    return cap, budget


def _choose_tiles(C, W, V, P, x_dtype, a_dtype, o_dtype):
    """Pick (TC, TP) and a matching vmem_limit_bytes."""
    cap, budget = _vmem_info()
    xb = jnp.dtype(x_dtype).itemsize
    ab = jnp.dtype(a_dtype).itemsize
    ob = jnp.dtype(o_dtype).itemsize

    # P has already been padded to a multiple of 128 by the wrapper.
    p_cands = [t for t in (2048, 1024, 512, 256, 128) if P % t == 0] or [P]
    c_cands = [c for c in (512, 256, 128, 64, 32, 16, 8, 4, 2, 1)
               if c <= C and C % c == 0] or [C]

    def usage(TC, TP):
        dma = 2 * TP * (TC * W * xb + V * W * ab + TC * V * ob)  # double-buffered blocks
        comp = 2 * TC * V * TP * 4                               # f32 acc + bcast headroom
        return dma + comp

    for TP in p_cands:           # biggest P-tile first (amortizes step overhead,
        for TC in c_cands:       # long contiguous DMA rows), then biggest TC that fits
            total = usage(TC, TP)
            if total <= budget:
                limit = min(max(total + (8 << 20), 16 << 20), int(cap * 0.45))
                return TC, TP, limit

    TC, TP = c_cands[-1], p_cands[-1]
    total = usage(TC, TP)
    limit = min(max(total + (8 << 20), 16 << 20), int(cap * 0.45))
    return TC, TP, limit


def patch_nconv(x, A):
    """x: (B, C, W, P), A: (B, P, V, W)  ->  out: (B, C, V, P)."""
    B, C, W, P = x.shape
    Ab, Ap, V, Aw = A.shape
    assert (B, P, W) == (Ab, Ap, Aw), "shape mismatch between x and A"

    out_dtype = jnp.result_type(x.dtype, A.dtype)

    # Single glue pass over the small A tensor: (B, P, V, W) -> (B, V, W, P)
    # so that P (the lane axis of x / out) is also A's lane axis.
    # (For producers that can emit A in this layout directly, skip this.)
    a_k = jnp.transpose(A, (0, 2, 3, 1))

    # Lane-dense P: pad to a multiple of 128 so stores are unmasked vst, then
    # slice the padded tail off the result.  Padded x columns are zero, so the
    # padded outputs are garbage-free and simply discarded.
    P_pad = int(pl.cdiv(P, 128)) * 128
    if P_pad != P:
        pad = P_pad - P
        x_k = jnp.pad(x, ((0, 0), (0, 0), (0, 0), (0, pad)))
        a_k = jnp.pad(a_k, ((0, 0), (0, 0), (0, 0), (0, pad)))
    else:
        x_k = x

    TC, TP, vmem_limit = _choose_tiles(C, W, V, P_pad,
                                       x_k.dtype, a_k.dtype, out_dtype)

    # NOTE: for bf16 inputs a further ~2x HBM saving is possible by flattening
    # (C, W) / (C, V) into a single second-minor axis (16-row bf16 tiling);
    # kept in the simpler 4-D layout here.

    out = pl.pallas_call(
        _patch_nconv_kernel,
        out_shape=jax.ShapeDtypeStruct((B, C, V, P_pad), out_dtype),
        grid_spec=pltpu.PrefetchScalarGridSpec(
            num_scalar_prefetch=0,
            # C-tile axis innermost: A's block index is constant across the
            # inner sweep, so the pipeline keeps the A block resident.
            grid=(B, P_pad // TP, C // TC),
            in_specs=[
                pl.BlockSpec((1, TC, W, TP), lambda b, pi, ci: (b, ci, 0, pi)),
                pl.BlockSpec((1, V, W, TP), lambda b, pi, ci: (b, 0, 0, pi)),
            ],
            out_specs=pl.BlockSpec((1, TC, V, TP),
                                   lambda b, pi, ci: (b, ci, 0, pi)),
        ),
        compiler_params=pltpu.CompilerParams(
            # Every grid step is independent (W-contraction is fully inside
            # each step), so all axes are parallel -> v7x 2-TC sharding.
            dimension_semantics=("parallel", "parallel", "parallel"),
            vmem_limit_bytes=vmem_limit,
        ),
    )(x_k, a_k)

    if P_pad != P:
        out = out[..., :P]
    return out


if __name__ == "__main__":
    key = jax.random.PRNGKey(0)
    kx, ka = jax.random.split(key)

    B, C, W, V, P = 2, 4, 8, 8, 16
    x = jax.random.normal(kx, (B, C, W, P), dtype=jnp.float32)
    A = jax.random.normal(ka, (B, P, V, W), dtype=jnp.float32)

    out = jax.block_until_ready(patch_nconv(x, A))

    # Sanity check against the plain-JAX einsum reference.
    ref = jnp.einsum('bcwp,bpvw->bcvp', x, A)
    assert out.shape == (B, C, V, P)
    assert jnp.allclose(out, ref, atol=1e-5, rtol=1e-5)

    print("KERNEL_OK")
</pallas_src>

<mosaic_0001>
module attributes {stable_mosaic.version = 11 : i64} {
  func.func @_patch_nconv_kernel(%arg0: i32, %arg1: i32, %arg2: i32, %arg3: memref<1x4x8x128xf32, #tpu.memory_space<vmem>>, %arg4: memref<1x8x8x128xf32, #tpu.memory_space<vmem>>, %arg5: memref<1x4x8x128xf32, #tpu.memory_space<vmem>>) attributes {dimension_semantics = [#tpu.dimension_semantics<parallel>, #tpu.dimension_semantics<parallel>, #tpu.dimension_semantics<parallel>], iteration_bounds = array<i64: 2, 1, 1>, scalar_prefetch = 0 : i64, scratch_operands = 0 : i64, tpu.core_type = #tpu.core_type<tc>, window_params = [{transform_indices = @transform_0, window_bounds = array<i64: 1, 4, 8, 128>}, {transform_indices = @transform_1, window_bounds = array<i64: 1, 8, 8, 128>}, {transform_indices = @transform_2, window_bounds = array<i64: 1, 4, 8, 128>}]} {
    %c0 = arith.constant 0 : index
    %c0_0 = arith.constant 0 : index
    %c0_1 = arith.constant 0 : index
    %c0_2 = arith.constant 0 : index
    %0 = vector.load %arg3[%c0, %c0_0, %c0_1, %c0_2] : memref<1x4x8x128xf32, #tpu.memory_space<vmem>>, vector<1x4x1x128xf32>
    %1 = vector.shape_cast %0 : vector<1x4x1x128xf32> to vector<4x128xf32>
    %c0_3 = arith.constant 0 : index
    %c0_4 = arith.constant 0 : index
    %c0_5 = arith.constant 0 : index
    %c0_6 = arith.constant 0 : index
    %2 = vector.load %arg4[%c0_3, %c0_4, %c0_5, %c0_6] : memref<1x8x8x128xf32, #tpu.memory_space<vmem>>, vector<1x8x1x128xf32>
    %3 = vector.shape_cast %2 : vector<1x8x1x128xf32> to vector<8x128xf32>
    %4 = vector.shape_cast %1 : vector<4x128xf32> to vector<4x1x128xf32>
    %5 = vector.shape_cast %3 : vector<8x128xf32> to vector<1x8x128xf32>
    %6 = vector.broadcast %4 : vector<4x1x128xf32> to vector<4x8x128xf32>
    %7 = vector.broadcast %5 : vector<1x8x128xf32> to vector<4x8x128xf32>
    %8 = arith.mulf %6, %7 : vector<4x8x128xf32>
    %c0_7 = arith.constant 0 : index
    %c0_8 = arith.constant 0 : index
    %c1 = arith.constant 1 : index
    %c0_9 = arith.constant 0 : index
    %9 = vector.load %arg3[%c0_7, %c0_8, %c1, %c0_9] : memref<1x4x8x128xf32, #tpu.memory_space<vmem>>, vector<1x4x1x128xf32>
    %10 = vector.shape_cast %9 : vector<1x4x1x128xf32> to vector<4x128xf32>
    %c0_10 = arith.constant 0 : index
    %c0_11 = arith.constant 0 : index
    %c1_12 = arith.constant 1 : index
    %c0_13 = arith.constant 0 : index
    %11 = vector.load %arg4[%c0_10, %c0_11, %c1_12, %c0_13] : memref<1x8x8x128xf32, #tpu.memory_space<vmem>>, vector<1x8x1x128xf32>
    %12 = vector.shape_cast %11 : vector<1x8x1x128xf32> to vector<8x128xf32>
    %13 = vector.shape_cast %10 : vector<4x128xf32> to vector<4x1x128xf32>
    %14 = vector.shape_cast %12 : vector<8x128xf32> to vector<1x8x128xf32>
    %15 = vector.broadcast %13 : vector<4x1x128xf32> to vector<4x8x128xf32>
    %16 = vector.broadcast %14 : vector<1x8x128xf32> to vector<4x8x128xf32>
    %17 = arith.mulf %15, %16 : vector<4x8x128xf32>
    %18 = arith.addf %8, %17 : vector<4x8x128xf32>
    %c0_14 = arith.constant 0 : index
    %c0_15 = arith.constant 0 : index
    %c2 = arith.constant 2 : index
    %c0_16 = arith.constant 0 : index
    %19 = vector.load %arg3[%c0_14, %c0_15, %c2, %c0_16] : memref<1x4x8x128xf32, #tpu.memory_space<vmem>>, vector<1x4x1x128xf32>
    %20 = vector.shape_cast %19 : vector<1x4x1x128xf32> to vector<4x128xf32>
    %c0_17 = arith.constant 0 : index
    %c0_18 = arith.constant 0 : index
    %c2_19 = arith.constant 2 : index
    %c0_20 = arith.constant 0 : index
    %21 = vector.load %arg4[%c0_17, %c0_18, %c2_19, %c0_20] : memref<1x8x8x128xf32, #tpu.memory_space<vmem>>, vector<1x8x1x128xf32>
    %22 = vector.shape_cast %21 : vector<1x8x1x128xf32> to vector<8x128xf32>
    %23 = vector.shape_cast %20 : vector<4x128xf32> to vector<4x1x128xf32>
    %24 = vector.shape_cast %22 : vector<8x128xf32> to vector<1x8x128xf32>
    %25 = vector.broadcast %23 : vector<4x1x128xf32> to vector<4x8x128xf32>
    %26 = vector.broadcast %24 : vector<1x8x128xf32> to vector<4x8x128xf32>
    %27 = arith.mulf %25, %26 : vector<4x8x128xf32>
    %28 = arith.addf %18, %27 : vector<4x8x128xf32>
    %c0_21 = arith.constant 0 : index
    %c0_22 = arith.constant 0 : index
    %c3 = arith.constant 3 : index
    %c0_23 = arith.constant 0 : index
    %29 = vector.load %arg3[%c0_21, %c0_22, %c3, %c0_23] : memref<1x4x8x128xf32, #tpu.memory_space<vmem>>, vector<1x4x1x128xf32>
    %30 = vector.shape_cast %29 : vector<1x4x1x128xf32> to vector<4x128xf32>
    %c0_24 = arith.constant 0 : index
    %c0_25 = arith.constant 0 : index
    %c3_26 = arith.constant 3 : index
    %c0_27 = arith.constant 0 : index
    %31 = vector.load %arg4[%c0_24, %c0_25, %c3_26, %c0_27] : memref<1x8x8x128xf32, #tpu.memory_space<vmem>>, vector<1x8x1x128xf32>
    %32 = vector.shape_cast %31 : vector<1x8x1x128xf32> to vector<8x128xf32>
    %33 = vector.shape_cast %30 : vector<4x128xf32> to vector<4x1x128xf32>
    %34 = vector.shape_cast %32 : vector<8x128xf32> to vector<1x8x128xf32>
    %35 = vector.broadcast %33 : vector<4x1x128xf32> to vector<4x8x128xf32>
    %36 = vector.broadcast %34 : vector<1x8x128xf32> to vector<4x8x128xf32>
    %37 = arith.mulf %35, %36 : vector<4x8x128xf32>
    %38 = arith.addf %28, %37 : vector<4x8x128xf32>
    %c0_28 = arith.constant 0 : index
    %c0_29 = arith.constant 0 : index
    %c4 = arith.constant 4 : index
    %c0_30 = arith.constant 0 : index
    %39 = vector.load %arg3[%c0_28, %c0_29, %c4, %c0_30] : memref<1x4x8x128xf32, #tpu.memory_space<vmem>>, vector<1x4x1x128xf32>
    %40 = vector.shape_cast %39 : vector<1x4x1x128xf32> to vector<4x128xf32>
    %c0_31 = arith.constant 0 : index
    %c0_32 = arith.constant 0 : index
    %c4_33 = arith.constant 4 : index
    %c0_34 = arith.constant 0 : index
    %41 = vector.load %arg4[%c0_31, %c0_32, %c4_33, %c0_34] : memref<1x8x8x128xf32, #tpu.memory_space<vmem>>, vector<1x8x1x128xf32>
    %42 = vector.shape_cast %41 : vector<1x8x1x128xf32> to vector<8x128xf32>
    %43 = vector.shape_cast %40 : vector<4x128xf32> to vector<4x1x128xf32>
    %44 = vector.shape_cast %42 : vector<8x128xf32> to vector<1x8x128xf32>
    %45 = vector.broadcast %43 : vector<4x1x128xf32> to vector<4x8x128xf32>
    %46 = vector.broadcast %44 : vector<1x8x128xf32> to vector<4x8x128xf32>
    %47 = arith.mulf %45, %46 : vector<4x8x128xf32>
    %48 = arith.addf %38, %47 : vector<4x8x128xf32>
    %c0_35 = arith.constant 0 : index
    %c0_36 = arith.constant 0 : index
    %c5 = arith.constant 5 : index
    %c0_37 = arith.constant 0 : index
    %49 = vector.load %arg3[%c0_35, %c0_36, %c5, %c0_37] : memref<1x4x8x128xf32, #tpu.memory_space<vmem>>, vector<1x4x1x128xf32>
    %50 = vector.shape_cast %49 : vector<1x4x1x128xf32> to vector<4x128xf32>
    %c0_38 = arith.constant 0 : index
    %c0_39 = arith.constant 0 : index
    %c5_40 = arith.constant 5 : index
    %c0_41 = arith.constant 0 : index
    %51 = vector.load %arg4[%c0_38, %c0_39, %c5_40, %c0_41] : memref<1x8x8x128xf32, #tpu.memory_space<vmem>>, vector<1x8x1x128xf32>
    %52 = vector.shape_cast %51 : vector<1x8x1x128xf32> to vector<8x128xf32>
    %53 = vector.shape_cast %50 : vector<4x128xf32> to vector<4x1x128xf32>
    %54 = vector.shape_cast %52 : vector<8x128xf32> to vector<1x8x128xf32>
    %55 = vector.broadcast %53 : vector<4x1x128xf32> to vector<4x8x128xf32>
    %56 = vector.broadcast %54 : vector<1x8x128xf32> to vector<4x8x128xf32>
    %57 = arith.mulf %55, %56 : vector<4x8x128xf32>
    %58 = arith.addf %48, %57 : vector<4x8x128xf32>
    %c0_42 = arith.constant 0 : index
    %c0_43 = arith.constant 0 : index
    %c6 = arith.constant 6 : index
    %c0_44 = arith.constant 0 : index
    %59 = vector.load %arg3[%c0_42, %c0_43, %c6, %c0_44] : memref<1x4x8x128xf32, #tpu.memory_space<vmem>>, vector<1x4x1x128xf32>
    %60 = vector.shape_cast %59 : vector<1x4x1x128xf32> to vector<4x128xf32>
    %c0_45 = arith.constant 0 : index
    %c0_46 = arith.constant 0 : index
    %c6_47 = arith.constant 6 : index
    %c0_48 = arith.constant 0 : index
    %61 = vector.load %arg4[%c0_45, %c0_46, %c6_47, %c0_48] : memref<1x8x8x128xf32, #tpu.memory_space<vmem>>, vector<1x8x1x128xf32>
    %62 = vector.shape_cast %61 : vector<1x8x1x128xf32> to vector<8x128xf32>
    %63 = vector.shape_cast %60 : vector<4x128xf32> to vector<4x1x128xf32>
    %64 = vector.shape_cast %62 : vector<8x128xf32> to vector<1x8x128xf32>
    %65 = vector.broadcast %63 : vector<4x1x128xf32> to vector<4x8x128xf32>
    %66 = vector.broadcast %64 : vector<1x8x128xf32> to vector<4x8x128xf32>
    %67 = arith.mulf %65, %66 : vector<4x8x128xf32>
    %68 = arith.addf %58, %67 : vector<4x8x128xf32>
    %c0_49 = arith.constant 0 : index
    %c0_50 = arith.constant 0 : index
    %c7 = arith.constant 7 : index
    %c0_51 = arith.constant 0 : index
    %69 = vector.load %arg3[%c0_49, %c0_50, %c7, %c0_51] : memref<1x4x8x128xf32, #tpu.memory_space<vmem>>, vector<1x4x1x128xf32>
    %70 = vector.shape_cast %69 : vector<1x4x1x128xf32> to vector<4x128xf32>
    %c0_52 = arith.constant 0 : index
    %c0_53 = arith.constant 0 : index
    %c7_54 = arith.constant 7 : index
    %c0_55 = arith.constant 0 : index
    %71 = vector.load %arg4[%c0_52, %c0_53, %c7_54, %c0_55] : memref<1x8x8x128xf32, #tpu.memory_space<vmem>>, vector<1x8x1x128xf32>
    %72 = vector.shape_cast %71 : vector<1x8x1x128xf32> to vector<8x128xf32>
    %73 = vector.shape_cast %70 : vector<4x128xf32> to vector<4x1x128xf32>
    %74 = vector.shape_cast %72 : vector<8x128xf32> to vector<1x8x128xf32>
    %75 = vector.broadcast %73 : vector<4x1x128xf32> to vector<4x8x128xf32>
    %76 = vector.broadcast %74 : vector<1x8x128xf32> to vector<4x8x128xf32>
    %77 = arith.mulf %75, %76 : vector<4x8x128xf32>
    %78 = arith.addf %68, %77 : vector<4x8x128xf32>
    %c0_56 = arith.constant 0 : index
    %c0_57 = arith.constant 0 : index
    %c0_58 = arith.constant 0 : index
    %c0_59 = arith.constant 0 : index
    %79 = vector.load %arg5[%c0_56, %c0_57, %c0_58, %c0_59] : memref<1x4x8x128xf32, #tpu.memory_space<vmem>>, vector<1x4x8x128xf32>
    %80 = vector.shape_cast %79 : vector<1x4x8x128xf32> to vector<4x8x128xf32>
    %81 = vector.shape_cast %78 : vector<4x8x128xf32> to vector<1x4x8x128xf32>
    tpu.vector_store %arg5[%c0_56, %c0_57, %c0_58, %c0_59], %81 {strides = array<i32>} : memref<1x4x8x128xf32, #tpu.memory_space<vmem>>, vector<1x4x8x128xf32>,
    return
  }
  func.func @transform_0(%arg0: i32, %arg1: i32, %arg2: i32) -> (i32, i32, i32, i32) {
    %c0_i32 = arith.constant 0 : i32
    %c0_i32_0 = arith.constant 0 : i32
    return %arg0, %arg2, %c0_i32, %arg1 : i32, i32, i32, i32
  }
  func.func @transform_1(%arg0: i32, %arg1: i32, %arg2: i32) -> (i32, i32, i32, i32) {
    %c0_i32 = arith.constant 0 : i32
    %c0_i32_0 = arith.constant 0 : i32
    %c0_i32_1 = arith.constant 0 : i32
    return %arg0, %c0_i32, %c0_i32_0, %arg1 : i32, i32, i32, i32
  }
  func.func @transform_2(%arg0: i32, %arg1: i32, %arg2: i32) -> (i32, i32, i32, i32) {
    %c0_i32 = arith.constant 0 : i32
    %c0_i32_0 = arith.constant 0 : i32
    return %arg0, %arg2, %c0_i32, %arg1 : i32, i32, i32, i32
  }
}

</mosaic_0001>

<llo_original>
// kernel: tpu_custom_call.1
$region0: #{tpu_custom_call.1}
  #allocation0 [shape = 'u32[]', space=smem, size = 0x4, offset = 0x4, fixed_abs, tag = 'smem constant byte address 0x4 - core index']
  #allocation1 [shape = 'u32[144,128]{1,0:T(1,128)}', space=vmem, size = 0x12000, scoped, tag = 'internal scratch']
  %s0 = inlined_call_operand.hbm [shape: f32[2,4,8,128], index: 0, kind: input, shape index: {}]
  %s1 = inlined_call_operand.hbm [shape: f32[2,8,8,128], index: 1, kind: input, shape index: {}]
  %s2 = inlined_call_operand.hbm [shape: f32[2,4,8,128], index: 2, kind: output, shape index: {}]
  %s3 = sld [smem:[#allocation0]]
  $region49: #{tpu_custom_call.1} parent=0
    _
  %s5 = ssub.s32 1, %s3
  %s6 = scalar_select 0, %s5, %s3
  $region1: #{tpu_custom_call.1} parent=0
    #allocation2 [shape = 'u8[32768]{0}', space=vmem, size = 0x8000, scoped, tag = 'input window, operand 0']
    #allocation3 [shape = 's32[2]{0}', space=sflag, size = 0x8, scoped, tag = 'scoped memory for tpu_custom_call.1']
    #allocation4 [shape = 's32[2]{0}', space=sflag, size = 0x8, scoped, tag = 'scoped memory for tpu_custom_call.1']
    #allocation5 [shape = 'u8[65536]{0}', space=vmem, size = 0x10000, scoped, tag = 'input window, operand 1']
    #allocation6 [shape = 's32[2]{0}', space=sflag, size = 0x8, scoped, tag = 'scoped memory for tpu_custom_call.1']
    #allocation7 [shape = 'u8[32768]{0}', space=vmem, size = 0x8000, scoped, tag = 'output window, operand 0']
    %7 = vsyncpa [#allocation3], 0
    %s8 = scalar_lea.sflag [#allocation3], 1
    %9 = vsyncpa %s8, 0
    %10 = vsyncpa [#allocation6], 0
    %s11 = scalar_lea.sflag [#allocation6], 1
    %12 = vsyncpa %s11, 0
    %13 = vsyncpa [#allocation4], 0
    %s14 = scalar_lea.sflag [#allocation4], 1
    %15 = vsyncpa %s14, 0
    loop: start=0, step=1, limit=4
    $region2: #{tpu_custom_call.1} parent=1 // loop_pre_header
      _
    $region3: #{tpu_custom_call.1} parent=1 // loop_header
      %s17 = sphi 0, %s21
      %p18 = scmp.ge.s32.totalorder %s17, 4
      %s24 = sphi 0, %s43
      %s25 = sphi 0, %s39
      %s26 = sphi 0, %s35
      %s27 = sphi 0, %s24
      %s28 = sphi 0, %s25
      %s29 = sphi 0, %s26
      %s30 = sphi 0, %s27
      %s31 = sphi 0, %s28
      %s32 = sphi 0, %s29
      %s50 = sphi 0, %s52
      %s53 = sphi 0, %s50
      %s54 = sphi 0, %s53
      %s70 = sphi 0, %s54
      %s78 = sphi 0, %s80
      %s81 = sphi 0, %s78
      %s82 = sphi 0, %s81
      %s98 = sphi 0, %s82
      %s108 = sphi 0, %s110
      %s111 = sphi 0, %s108
      %s112 = sphi 0, %s111
      %s128 = sphi 0, %s112
    $region4: #{tpu_custom_call.1} parent=1 // loop_header_branch
      %20 = sbr.rel (%p18) target = $region8
    $region5: #{tpu_custom_call.1} parent=1 // loop_body
      %s22 = ssub.s32 %s17, 1
      %s23 = ssub.s32 %s17, 2
      %s33 = sadd.s32 1, %s26
      %p34 = scmp.ge.s32.totalorder %s33, 1
      %s35 = scalar_select %p34, 0, %s33
      %s36 = sadd.s32 1, %s25
      %s37 = scalar_select %p34, %s36, %s25
      %p38 = scmp.ge.s32.totalorder %s37, 1
      %s39 = scalar_select %p38, 0, %s37
      %s40 = sadd.s32 1, %s24
      %s41 = scalar_select %p38, %s40, %s24
      %p42 = scmp.ge.s32.totalorder %s41, 2
      %s43 = scalar_select %p42, 0, %s41
      %s44 = ssub.s32 %s24, %s43
      %s45 = ssub.s32 %s26, %s35
      %s46 = sor.u32 %s44, %s45
      %s47 = ssub.s32 %s25, %s39
      %s48 = sor.u32 %s46, %s47
      %p49 = scmp.eq.s32.totalorder %s48, 0
      %s51 = sadd.s32 %s50, 1
      %s52 = scalar_select %p49, %s50, %s51
      %p55 = pneg %p49
      %p56 = scmp.eq.s32.totalorder %s17, 1
      %p57 = por %p55, %p56
      %p58 = scmp.ne.s32.totalorder %s50, %s53
      %p59 = scmp.eq.s32.totalorder %s17, 0
      %p60 = por %p58, %p59
      %p61 = scmp.ne.s32.totalorder %s50, %s53
      %p62 = scmp.eq.s32.totalorder %s22, 1
      %p63 = por %p61, %p62
      %p64 = scmp.ne.s32.totalorder %s53, %s54
      %p65 = scmp.eq.s32.totalorder %s22, 0
      %p66 = por %p64, %p65
      %p67 = scmp.ne.s32.totalorder %s53, %s54
      %p68 = scmp.eq.s32.totalorder %s23, 1
      %p69 = por %p67, %p68
      %p71 = scmp.ne.s32.totalorder %s54, %s70
      %p72 = scmp.eq.s32.totalorder %s23, 0
      %p73 = por %p71, %p72
      %s74 = ssub.s32 %s24, %s43
      %s75 = ssub.s32 %s25, %s39
      %s76 = sor.u32 %s74, %s75
      %p77 = scmp.eq.s32.totalorder %s76, 0
      %s79 = sadd.s32 %s78, 1
      %s80 = scalar_select %p77, %s78, %s79
      %p83 = pneg %p77
      %p84 = scmp.eq.s32.totalorder %s17, 1
      %p85 = por %p83, %p84
      %p86 = scmp.ne.s32.totalorder %s78, %s81
      %p87 = scmp.eq.s32.totalorder %s17, 0
      %p88 = por %p86, %p87
      %p89 = scmp.ne.s32.totalorder %s78, %s81
      %p90 = scmp.eq.s32.totalorder %s22, 1
      %p91 = por %p89, %p90
      %p92 = scmp.ne.s32.totalorder %s81, %s82
      %p93 = scmp.eq.s32.totalorder %s22, 0
      %p94 = por %p92, %p93
      %p95 = scmp.ne.s32.totalorder %s81, %s82
      %p96 = scmp.eq.s32.totalorder %s23, 1
      %p97 = por %p95, %p96
      %p99 = scmp.ne.s32.totalorder %s82, %s98
      %p100 = scmp.eq.s32.totalorder %s23, 0
      %p101 = por %p99, %p100
      %s102 = ssub.s32 %s24, %s43
      %s103 = ssub.s32 %s26, %s35
      %s104 = sor.u32 %s102, %s103
      %s105 = ssub.s32 %s25, %s39
      %s106 = sor.u32 %s104, %s105
      %p107 = scmp.eq.s32.totalorder %s106, 0
      %s109 = sadd.s32 %s108, 1
      %s110 = scalar_select %p107, %s108, %s109
      %p113 = pneg %p107
      %p114 = scmp.eq.s32.totalorder %s17, 1
      %p115 = por %p113, %p114
      %p116 = scmp.ne.s32.totalorder %s108, %s111
      %p117 = scmp.eq.s32.totalorder %s17, 0
      %p118 = por %p116, %p117
      %p119 = scmp.ne.s32.totalorder %s108, %s111
      %p120 = scmp.eq.s32.totalorder %s22, 1
      %p121 = por %p119, %p120
      %p122 = scmp.ne.s32.totalorder %s111, %s112
      %p123 = scmp.eq.s32.totalorder %s22, 0
      %p124 = por %p122, %p123
      %p125 = scmp.ne.s32.totalorder %s111, %s112
      %p126 = scmp.eq.s32.totalorder %s23, 1
      %p127 = por %p125, %p126
      %p129 = scmp.ne.s32.totalorder %s112, %s128
      %p130 = scmp.eq.s32.totalorder %s23, 0
      %p131 = por %p129, %p130
      %p132 = scmp.le.s32.totalorder 1, %s17
      %p133 = scmp.lt.s32.totalorder %s17, 3
      %p134 = pnand %p132, %p133
      %p135 = pneg %p134
      // Predicated region
      $region9: #{tpu_custom_call.1} parent=5 // pred_check
        _
      $region10: #{tpu_custom_call.1} parent=5 // pred_check_branch
        %137 = sbr.rel (%p134) target = $region12
      $region11: #{tpu_custom_call.1} parent=5 // pred_region
        %s138 = ssub.s32 %s17, 1
      $region12: #{tpu_custom_call.1} parent=5 // pred_fallthru
        _
      %p139 = scmp.lt.s32.totalorder %s17, 2
      // Predicated region
      $region13: #{tpu_custom_call.1} parent=5 // pred_check
        %p140 = pneg %p139
      $region14: #{tpu_custom_call.1} parent=5 // pred_check_branch
        %142 = sbr.rel (%p140) target = $region16
      $region15: #{tpu_custom_call.1} parent=5 // pred_region
        // Predicated region
        $region17: #{tpu_custom_call.1} parent=15 // pred_check
          %p143 = pneg %p60
        $region18: #{tpu_custom_call.1} parent=15 // pred_check_branch
          %145 = sbr.rel (%p143) target = $region20
        $region19: #{tpu_custom_call.1} parent=15 // pred_region
          %s146 = sand.u32 %s50, 1
          %s147 = scalar_lea.sflag [#allocation3], %s146
          %s148 = sand.u32 %s50, 1
          %s149 = smul.addr %s148, 32
          %s150 = scalar_lea.vmem [#allocation2], %s149
          %s151 = smul.u32 4, %s26
          %s153 = ssub.s32 512, 512
          %154 = vsyncadd %s147, %s153
          %s155 = sadd.s32 %s25, %s151
          %s156 = smul.addr %s24, 4
          %s157 = sadd.s32 %s155, %s156
          %s158 = smul.addr %s157, 128
          %s159 = scalar_lea.hbm %s0, %s158
          %s160 = sshll.u32 %s150, 4
          %s161 = int_to_ptr.vmem [resolvable:$true] %s160
          %166 = dma.hbm_to_vmem [thread:$0]  %s159, 512, %s161, %s147, 128, 128, 8
        $region20: #{tpu_custom_call.1} parent=15 // pred_fallthru
          _
        // Predicated region
        $region21: #{tpu_custom_call.1} parent=15 // pred_check
          %p167 = pneg %p88
        $region22: #{tpu_custom_call.1} parent=15 // pred_check_branch
          %169 = sbr.rel (%p167) target = $region24
        $region23: #{tpu_custom_call.1} parent=15 // pred_region
          %s170 = sand.u32 %s78, 1
          %s171 = scalar_lea.sflag [#allocation6], %s170
          %s172 = sand.u32 %s78, 1
          %s173 = smul.addr %s172, 64
          %s174 = scalar_lea.vmem [#allocation5], %s173
          %s176 = ssub.s32 1024, 1024
          %177 = vsyncadd %s171, %s176
          %s178 = smul.addr %s24, 8
          %s179 = sadd.s32 %s25, %s178
          %s180 = smul.addr %s179, 128
          %s181 = scalar_lea.hbm %s1, %s180
          %s182 = sshll.u32 %s174, 4
          %s183 = int_to_ptr.vmem [resolvable:$true] %s182
          %188 = dma.hbm_to_vmem [thread:$0]  %s181, 1024, %s183, %s171, 128, 128, 8
        $region24: #{tpu_custom_call.1} parent=15 // pred_fallthru
          _
      $region16: #{tpu_custom_call.1} parent=5 // pred_fallthru
        _
      %p189 = scmp.le.s32.totalorder 1, %s17
      %p190 = scmp.lt.s32.totalorder %s17, 3
      %p191 = pnand %p189, %p190
      %p192 = pneg %p191
      // Predicated region
      $region25: #{tpu_custom_call.1} parent=5 // pred_check
        _
      $region26: #{tpu_custom_call.1} parent=5 // pred_check_branch
        %194 = sbr.rel (%p191) target = $region28
      $region27: #{tpu_custom_call.1} parent=5 // pred_region
        %s195 = ssub.s32 %s17, 1
        %s196 = sand.u32 %s53, 1
        %s197 = scalar_lea.sflag [#allocation3], %s196
        %s198 = sand.u32 %s53, 1
        %s199 = smul.addr %s198, 32
        %s200 = scalar_lea.vmem [#allocation2], %s199
        // Predicated region
        $region29: #{tpu_custom_call.1} parent=27 // pred_check
          %p201 = pneg %p66
        $region30: #{tpu_custom_call.1} parent=27 // pred_check_branch
          %203 = sbr.rel (%p201) target = $region32
        $region31: #{tpu_custom_call.1} parent=27 // pred_region
          %204 = dma.done %s197, 512
        $region32: #{tpu_custom_call.1} parent=27 // pred_fallthru
          _
        %s205 = sand.u32 %s81, 1
        %s206 = scalar_lea.sflag [#allocation6], %s205
        %s207 = sand.u32 %s81, 1
        %s208 = smul.addr %s207, 64
        %s209 = scalar_lea.vmem [#allocation5], %s208
        // Predicated region
        $region33: #{tpu_custom_call.1} parent=27 // pred_check
          %p210 = pneg %p94
        $region34: #{tpu_custom_call.1} parent=27 // pred_check_branch
          %212 = sbr.rel (%p210) target = $region36
        $region35: #{tpu_custom_call.1} parent=27 // pred_region
          %213 = dma.done %s206, 1024
        $region36: #{tpu_custom_call.1} parent=27 // pred_fallthru
          _
        %s214 = sand.u32 %s53, 1
        %s215 = scalar_lea.sflag [#allocation3], %s214
        %s216 = sand.u32 %s53, 1
        %s217 = smul.addr %s216, 32
        %s218 = scalar_lea.vmem [#allocation2], %s217
        %p219 = pneg %p66
        %p220 = pneg %p63
        %s221 = sand.u32 %s81, 1
        %s222 = scalar_lea.sflag [#allocation6], %s221
        %s223 = sand.u32 %s81, 1
        %s224 = smul.addr %s223, 64
        %s225 = scalar_lea.vmem [#allocation5], %s224
        %p226 = pneg %p94
        %p227 = pneg %p91
        %p228 = pneg %p124
        %p229 = pneg %p121
        %s230 = sand.u32 %s111, 1
        %s231 = scalar_lea.sflag [#allocation4], %s230
        %s232 = sand.u32 %s111, 1
        %s233 = smul.addr %s232, 32
        %s234 = scalar_lea.vmem [#allocation7], %s233
        %s235 = smul.u32 4, %s29
        %s236 = smul.u32 4, %s29
        %v237 = vld [vmem:[%s200] sm:$0x1]
        %v238 = vld [vmem:[%s200 + $0x8] sm:$0x1]
        %v239 = vld [vmem:[%s200 + $0x10] sm:$0x1]
        %v240 = vld [vmem:[%s200 + $0x18] sm:$0x1]
        %v241 = vld [vmem:[%s209] sm:$0x1]
        %v242 = vld [vmem:[%s209 + $0x8] sm:$0x1]
        %v243 = vld [vmem:[%s209 + $0x10] sm:$0x1]
        %v244 = vld [vmem:[%s209 + $0x18] sm:$0x1]
        %v245 = vld [vmem:[%s209 + $0x20] sm:$0x1]
        %v246 = vld [vmem:[%s209 + $0x28] sm:$0x1]
        %v247 = vld [vmem:[%s209 + $0x30] sm:$0x1]
        %v248 = vld [vmem:[%s209 + $0x38] sm:$0x1]
        %v249 = vlaneseq
        %v250 = vshrl.u32 %v249, 7
        %v251 = vsub.s32 0, %v250
        %v252 = vrot.slane %v237, %v251
        %v253 = vlaneseq
        %v254 = vshrl.u32 %v253, 7
        %v255 = vsub.s32 0, %v254
        %v256 = vrot.slane %v238, %v255
        %v257 = vlaneseq
        %v258 = vshrl.u32 %v257, 7
        %v259 = vsub.s32 0, %v258
        %v260 = vrot.slane %v239, %v259
        %v261 = vlaneseq
        %v262 = vshrl.u32 %v261, 7
        %v263 = vsub.s32 0, %v262
        %v264 = vrot.slane %v240, %v263
        %v273 = vrot.slane %v242, 7
        %vm274 = vcmask 1041409
        %v275 = vsel %vm274, %v273, %v241
        %v276 = vrot.slane %v243, 6
        %vm277 = vcmask 1042434
        %v278 = vsel %vm277, %v276, %v275
        %v279 = vrot.slane %v244, 5
        %vm280 = vcmask 1043459
        %v281 = vsel %vm280, %v279, %v278
        %v282 = vrot.slane %v245, 4
        %vm283 = vcmask 1044484
        %v284 = vsel %vm283, %v282, %v281
        %v285 = vrot.slane %v246, 3
        %vm286 = vcmask 1045509
        %v287 = vsel %vm286, %v285, %v284
        %v288 = vrot.slane %v247, 2
        %vm289 = vcmask 1046534
        %v290 = vsel %vm289, %v288, %v287
        %v291 = vrot.slane %v248, 1
        %vm292 = vcmask 1047559
        %v293 = vsel %vm292, %v291, %v290
        %v295 = vmul.f32 %v252, %v293
        %v296 = vmul.f32 %v256, %v293
        %v297 = vmul.f32 %v260, %v293
        %v298 = vmul.f32 %v264, %v293
        %v299 = vld [vmem:[%s200 + $0x1] sm:$0x1]
        %v300 = vld [vmem:[%s200 + $0x9] sm:$0x1]
        %v301 = vld [vmem:[%s200 + $0x11] sm:$0x1]
        %v302 = vld [vmem:[%s200 + $0x19] sm:$0x1]
        %v303 = vld [vmem:[%s209 + $0x1] sm:$0x1]
        %v304 = vld [vmem:[%s209 + $0x9] sm:$0x1]
        %v305 = vld [vmem:[%s209 + $0x11] sm:$0x1]
        %v306 = vld [vmem:[%s209 + $0x19] sm:$0x1]
        %v307 = vld [vmem:[%s209 + $0x21] sm:$0x1]
        %v308 = vld [vmem:[%s209 + $0x29] sm:$0x1]
        %v309 = vld [vmem:[%s209 + $0x31] sm:$0x1]
        %v310 = vld [vmem:[%s209 + $0x39] sm:$0x1]
        %v311 = vlaneseq
        %v312 = vshrl.u32 %v311, 7
        %v313 = vsub.s32 0, %v312
        %v314 = vrot.slane %v299, %v313
        %v315 = vlaneseq
        %v316 = vshrl.u32 %v315, 7
        %v317 = vsub.s32 0, %v316
        %v318 = vrot.slane %v300, %v317
        %v319 = vlaneseq
        %v320 = vshrl.u32 %v319, 7
        %v321 = vsub.s32 0, %v320
        %v322 = vrot.slane %v301, %v321
        %v323 = vlaneseq
        %v324 = vshrl.u32 %v323, 7
        %v325 = vsub.s32 0, %v324
        %v326 = vrot.slane %v302, %v325
        %v335 = vrot.slane %v304, 7
        %v336 = vsel %vm274, %v335, %v303
        %v337 = vrot.slane %v305, 6
        %v338 = vsel %vm277, %v337, %v336
        %v339 = vrot.slane %v306, 5
        %v340 = vsel %vm280, %v339, %v338
        %v341 = vrot.slane %v307, 4
        %v342 = vsel %vm283, %v341, %v340
        %v343 = vrot.slane %v308, 3
        %v344 = vsel %vm286, %v343, %v342
        %v345 = vrot.slane %v309, 2
        %v346 = vsel %vm289, %v345, %v344
        %v347 = vrot.slane %v310, 1
        %v348 = vsel %vm292, %v347, %v346
        %v350 = vmul.f32 %v314, %v348
        %v351 = vmul.f32 %v318, %v348
        %v352 = vmul.f32 %v322, %v348
        %v353 = vmul.f32 %v326, %v348
        %v354 = vadd.f32 %v295, %v350
        %v355 = vadd.f32 %v296, %v351
        %v356 = vadd.f32 %v297, %v352
        %v357 = vadd.f32 %v298, %v353
        %v358 = vld [vmem:[%s200 + $0x2] sm:$0x1]
        %v359 = vld [vmem:[%s200 + $0xa] sm:$0x1]
        %v360 = vld [vmem:[%s200 + $0x12] sm:$0x1]
        %v361 = vld [vmem:[%s200 + $0x1a] sm:$0x1]
        %v362 = vld [vmem:[%s209 + $0x2] sm:$0x1]
        %v363 = vld [vmem:[%s209 + $0xa] sm:$0x1]
        %v364 = vld [vmem:[%s209 + $0x12] sm:$0x1]
        %v365 = vld [vmem:[%s209 + $0x1a] sm:$0x1]
        %v366 = vld [vmem:[%s209 + $0x22] sm:$0x1]
        %v367 = vld [vmem:[%s209 + $0x2a] sm:$0x1]
        %v368 = vld [vmem:[%s209 + $0x32] sm:$0x1]
        %v369 = vld [vmem:[%s209 + $0x3a] sm:$0x1]
        %v370 = vlaneseq
        %v371 = vshrl.u32 %v370, 7
        %v372 = vsub.s32 0, %v371
        %v373 = vrot.slane %v358, %v372
        %v374 = vlaneseq
        %v375 = vshrl.u32 %v374, 7
        %v376 = vsub.s32 0, %v375
        %v377 = vrot.slane %v359, %v376
        %v378 = vlaneseq
        %v379 = vshrl.u32 %v378, 7
        %v380 = vsub.s32 0, %v379
        %v381 = vrot.slane %v360, %v380
        %v382 = vlaneseq
        %v383 = vshrl.u32 %v382, 7
        %v384 = vsub.s32 0, %v383
        %v385 = vrot.slane %v361, %v384
        %v394 = vrot.slane %v363, 7
        %v395 = vsel %vm274, %v394, %v362
        %v396 = vrot.slane %v364, 6
        %v397 = vsel %vm277, %v396, %v395
        %v398 = vrot.slane %v365, 5
        %v399 = vsel %vm280, %v398, %v397
        %v400 = vrot.slane %v366, 4
        %v401 = vsel %vm283, %v400, %v399
        %v402 = vrot.slane %v367, 3
        %v403 = vsel %vm286, %v402, %v401
        %v404 = vrot.slane %v368, 2
        %v405 = vsel %vm289, %v404, %v403
        %v406 = vrot.slane %v369, 1
        %v407 = vsel %vm292, %v406, %v405
        %v409 = vmul.f32 %v373, %v407
        %v410 = vmul.f32 %v377, %v407
        %v411 = vmul.f32 %v381, %v407
        %v412 = vmul.f32 %v385, %v407
        %v413 = vadd.f32 %v354, %v409
        %v414 = vadd.f32 %v355, %v410
        %v415 = vadd.f32 %v356, %v411
        %v416 = vadd.f32 %v357, %v412
        %v417 = vld [vmem:[%s200 + $0x3] sm:$0x1]
        %v418 = vld [vmem:[%s200 + $0xb] sm:$0x1]
        %v419 = vld [vmem:[%s200 + $0x13] sm:$0x1]
        %v420 = vld [vmem:[%s200 + $0x1b] sm:$0x1]
        %v421 = vld [vmem:[%s209 + $0x3] sm:$0x1]
        %v422 = vld [vmem:[%s209 + $0xb] sm:$0x1]
        %v423 = vld [vmem:[%s209 + $0x13] sm:$0x1]
        %v424 = vld [vmem:[%s209 + $0x1b] sm:$0x1]
        %v425 = vld [vmem:[%s209 + $0x23] sm:$0x1]
        %v426 = vld [vmem:[%s209 + $0x2b] sm:$0x1]
        %v427 = vld [vmem:[%s209 + $0x33] sm:$0x1]
        %v428 = vld [vmem:[%s209 + $0x3b] sm:$0x1]
        %v429 = vlaneseq
        %v430 = vshrl.u32 %v429, 7
        %v431 = vsub.s32 0, %v430
        %v432 = vrot.slane %v417, %v431
        %v433 = vlaneseq
        %v434 = vshrl.u32 %v433, 7
        %v435 = vsub.s32 0, %v434
        %v436 = vrot.slane %v418, %v435
        %v437 = vlaneseq
        %v438 = vshrl.u32 %v437, 7
        %v439 = vsub.s32 0, %v438
        %v440 = vrot.slane %v419, %v439
        %v441 = vlaneseq
        %v442 = vshrl.u32 %v441, 7
        %v443 = vsub.s32 0, %v442
        %v444 = vrot.slane %v420, %v443
        %v453 = vrot.slane %v422, 7
        %v454 = vsel %vm274, %v453, %v421
        %v455 = vrot.slane %v423, 6
        %v456 = vsel %vm277, %v455, %v454
        %v457 = vrot.slane %v424, 5
        %v458 = vsel %vm280, %v457, %v456
        %v459 = vrot.slane %v425, 4
        %v460 = vsel %vm283, %v459, %v458
        %v461 = vrot.slane %v426, 3
        %v462 = vsel %vm286, %v461, %v460
        %v463 = vrot.slane %v427, 2
        %v464 = vsel %vm289, %v463, %v462
        %v465 = vrot.slane %v428, 1
        %v466 = vsel %vm292, %v465, %v464
        %v468 = vmul.f32 %v432, %v466
        %v469 = vmul.f32 %v436, %v466
        %v470 = vmul.f32 %v440, %v466
        %v471 = vmul.f32 %v444, %v466
        %v472 = vadd.f32 %v413, %v468
        %v473 = vadd.f32 %v414, %v469
        %v474 = vadd.f32 %v415, %v470
        %v475 = vadd.f32 %v416, %v471
        %v476 = vld [vmem:[%s200 + $0x4] sm:$0x1]
        %v477 = vld [vmem:[%s200 + $0xc] sm:$0x1]
        %v478 = vld [vmem:[%s200 + $0x14] sm:$0x1]
        %v479 = vld [vmem:[%s200 + $0x1c] sm:$0x1]
        %v480 = vld [vmem:[%s209 + $0x4] sm:$0x1]
        %v481 = vld [vmem:[%s209 + $0xc] sm:$0x1]
        %v482 = vld [vmem:[%s209 + $0x14] sm:$0x1]
        %v483 = vld [vmem:[%s209 + $0x1c] sm:$0x1]
        %v484 = vld [vmem:[%s209 + $0x24] sm:$0x1]
        %v485 = vld [vmem:[%s209 + $0x2c] sm:$0x1]
        %v486 = vld [vmem:[%s209 + $0x34] sm:$0x1]
        %v487 = vld [vmem:[%s209 + $0x3c] sm:$0x1]
        %v488 = vlaneseq
        %v489 = vshrl.u32 %v488, 7
        %v490 = vsub.s32 0, %v489
        %v491 = vrot.slane %v476, %v490
        %v492 = vlaneseq
        %v493 = vshrl.u32 %v492, 7
        %v494 = vsub.s32 0, %v493
        %v495 = vrot.slane %v477, %v494
        %v496 = vlaneseq
        %v497 = vshrl.u32 %v496, 7
        %v498 = vsub.s32 0, %v497
        %v499 = vrot.slane %v478, %v498
        %v500 = vlaneseq
        %v501 = vshrl.u32 %v500, 7
        %v502 = vsub.s32 0, %v501
        %v503 = vrot.slane %v479, %v502
        %v512 = vrot.slane %v481, 7
        %v513 = vsel %vm274, %v512, %v480
        %v514 = vrot.slane %v482, 6
        %v515 = vsel %vm277, %v514, %v513
        %v516 = vrot.slane %v483, 5
        %v517 = vsel %vm280, %v516, %v515
        %v518 = vrot.slane %v484, 4
        %v519 = vsel %vm283, %v518, %v517
        %v520 = vrot.slane %v485, 3
        %v521 = vsel %vm286, %v520, %v519
        %v522 = vrot.slane %v486, 2
        %v523 = vsel %vm289, %v522, %v521
        %v524 = vrot.slane %v487, 1
        %v525 = vsel %vm292, %v524, %v523
        %v527 = vmul.f32 %v491, %v525
        %v528 = vmul.f32 %v495, %v525
        %v529 = vmul.f32 %v499, %v525
        %v530 = vmul.f32 %v503, %v525
        %v531 = vadd.f32 %v472, %v527
        %v532 = vadd.f32 %v473, %v528
        %v533 = vadd.f32 %v474, %v529
        %v534 = vadd.f32 %v475, %v530
        %v535 = vld [vmem:[%s200 + $0x5] sm:$0x1]
        %v536 = vld [vmem:[%s200 + $0xd] sm:$0x1]
        %v537 = vld [vmem:[%s200 + $0x15] sm:$0x1]
        %v538 = vld [vmem:[%s200 + $0x1d] sm:$0x1]
        %v539 = vld [vmem:[%s209 + $0x5] sm:$0x1]
        %v540 = vld [vmem:[%s209 + $0xd] sm:$0x1]
        %v541 = vld [vmem:[%s209 + $0x15] sm:$0x1]
        %v542 = vld [vmem:[%s209 + $0x1d] sm:$0x1]
        %v543 = vld [vmem:[%s209 + $0x25] sm:$0x1]
        %v544 = vld [vmem:[%s209 + $0x2d] sm:$0x1]
        %v545 = vld [vmem:[%s209 + $0x35] sm:$0x1]
        %v546 = vld [vmem:[%s209 + $0x3d] sm:$0x1]
        %v547 = vlaneseq
        %v548 = vshrl.u32 %v547, 7
        %v549 = vsub.s32 0, %v548
        %v550 = vrot.slane %v535, %v549
        %v551 = vlaneseq
        %v552 = vshrl.u32 %v551, 7
        %v553 = vsub.s32 0, %v552
        %v554 = vrot.slane %v536, %v553
        %v555 = vlaneseq
        %v556 = vshrl.u32 %v555, 7
        %v557 = vsub.s32 0, %v556
        %v558 = vrot.slane %v537, %v557
        %v559 = vlaneseq
        %v560 = vshrl.u32 %v559, 7
        %v561 = vsub.s32 0, %v560
        %v562 = vrot.slane %v538, %v561
        %v571 = vrot.slane %v540, 7
        %v572 = vsel %vm274, %v571, %v539
        %v573 = vrot.slane %v541, 6
        %v574 = vsel %vm277, %v573, %v572
        %v575 = vrot.slane %v542, 5
        %v576 = vsel %vm280, %v575, %v574
        %v577 = vrot.slane %v543, 4
        %v578 = vsel %vm283, %v577, %v576
        %v579 = vrot.slane %v544, 3
        %v580 = vsel %vm286, %v579, %v578
        %v581 = vrot.slane %v545, 2
        %v582 = vsel %vm289, %v581, %v580
        %v583 = vrot.slane %v546, 1
        %v584 = vsel %vm292, %v583, %v582
        %v586 = vmul.f32 %v550, %v584
        %v587 = vmul.f32 %v554, %v584
        %v588 = vmul.f32 %v558, %v584
        %v589 = vmul.f32 %v562, %v584
        %v590 = vadd.f32 %v531, %v586
        %v591 = vadd.f32 %v532, %v587
        %v592 = vadd.f32 %v533, %v588
        %v593 = vadd.f32 %v534, %v589
        %v594 = vld [vmem:[%s200 + $0x6] sm:$0x1]
        %v595 = vld [vmem:[%s200 + $0xe] sm:$0x1]
        %v596 = vld [vmem:[%s200 + $0x16] sm:$0x1]
        %v597 = vld [vmem:[%s200 + $0x1e] sm:$0x1]
        %v598 = vld [vmem:[%s209 + $0x6] sm:$0x1]
        %v599 = vld [vmem:[%s209 + $0xe] sm:$0x1]
        %v600 = vld [vmem:[%s209 + $0x16] sm:$0x1]
        %v601 = vld [vmem:[%s209 + $0x1e] sm:$0x1]
        %v602 = vld [vmem:[%s209 + $0x26] sm:$0x1]
        %v603 = vld [vmem:[%s209 + $0x2e] sm:$0x1]
        %v604 = vld [vmem:[%s209 + $0x36] sm:$0x1]
        %v605 = vld [vmem:[%s209 + $0x3e] sm:$0x1]
        %v606 = vlaneseq
        %v607 = vshrl.u32 %v606, 7
        %v608 = vsub.s32 0, %v607
        %v609 = vrot.slane %v594, %v608
        %v610 = vlaneseq
        %v611 = vshrl.u32 %v610, 7
        %v612 = vsub.s32 0, %v611
        %v613 = vrot.slane %v595, %v612
        %v614 = vlaneseq
        %v615 = vshrl.u32 %v614, 7
        %v616 = vsub.s32 0, %v615
        %v617 = vrot.slane %v596, %v616
        %v618 = vlaneseq
        %v619 = vshrl.u32 %v618, 7
        %v620 = vsub.s32 0, %v619
        %v621 = vrot.slane %v597, %v620
        %v630 = vrot.slane %v599, 7
        %v631 = vsel %vm274, %v630, %v598
        %v632 = vrot.slane %v600, 6
        %v633 = vsel %vm277, %v632, %v631
        %v634 = vrot.slane %v601, 5
        %v635 = vsel %vm280, %v634, %v633
        %v636 = vrot.slane %v602, 4
        %v637 = vsel %vm283, %v636, %v635
        %v638 = vrot.slane %v603, 3
        %v639 = vsel %vm286, %v638, %v637
        %v640 = vrot.slane %v604, 2
        %v641 = vsel %vm289, %v640, %v639
        %v642 = vrot.slane %v605, 1
        %v643 = vsel %vm292, %v642, %v641
        %v645 = vmul.f32 %v609, %v643
        %v646 = vmul.f32 %v613, %v643
        %v647 = vmul.f32 %v617, %v643
        %v648 = vmul.f32 %v621, %v643
        %v649 = vadd.f32 %v590, %v645
        %v650 = vadd.f32 %v591, %v646
        %v651 = vadd.f32 %v592, %v647
        %v652 = vadd.f32 %v593, %v648
        %v653 = vld [vmem:[%s200 + $0x7] sm:$0x1]
        %v654 = vld [vmem:[%s200 + $0xf] sm:$0x1]
        %v655 = vld [vmem:[%s200 + $0x17] sm:$0x1]
        %v656 = vld [vmem:[%s200 + $0x1f] sm:$0x1]
        %v657 = vld [vmem:[%s209 + $0x7] sm:$0x1]
        %v658 = vld [vmem:[%s209 + $0xf] sm:$0x1]
        %v659 = vld [vmem:[%s209 + $0x17] sm:$0x1]
        %v660 = vld [vmem:[%s209 + $0x1f] sm:$0x1]
        %v661 = vld [vmem:[%s209 + $0x27] sm:$0x1]
        %v662 = vld [vmem:[%s209 + $0x2f] sm:$0x1]
        %v663 = vld [vmem:[%s209 + $0x37] sm:$0x1]
        %v664 = vld [vmem:[%s209 + $0x3f] sm:$0x1]
        %v665 = vlaneseq
        %v666 = vshrl.u32 %v665, 7
        %v667 = vsub.s32 0, %v666
        %v668 = vrot.slane %v653, %v667
        %v669 = vlaneseq
        %v670 = vshrl.u32 %v669, 7
        %v671 = vsub.s32 0, %v670
        %v672 = vrot.slane %v654, %v671
        %v673 = vlaneseq
        %v674 = vshrl.u32 %v673, 7
        %v675 = vsub.s32 0, %v674
        %v676 = vrot.slane %v655, %v675
        %v677 = vlaneseq
        %v678 = vshrl.u32 %v677, 7
        %v679 = vsub.s32 0, %v678
        %v680 = vrot.slane %v656, %v679
        %v689 = vrot.slane %v658, 7
        %v690 = vsel %vm274, %v689, %v657
        %v691 = vrot.slane %v659, 6
        %v692 = vsel %vm277, %v691, %v690
        %v693 = vrot.slane %v660, 5
        %v694 = vsel %vm280, %v693, %v692
        %v695 = vrot.slane %v661, 4
        %v696 = vsel %vm283, %v695, %v694
        %v697 = vrot.slane %v662, 3
        %v698 = vsel %vm286, %v697, %v696
        %v699 = vrot.slane %v663, 2
        %v700 = vsel %vm289, %v699, %v698
        %v701 = vrot.slane %v664, 1
        %v702 = vsel %vm292, %v701, %v700
        %v704 = vmul.f32 %v668, %v702
        %v705 = vmul.f32 %v672, %v702
        %v706 = vmul.f32 %v676, %v702
        %v707 = vmul.f32 %v680, %v702
        %v708 = vadd.f32 %v649, %v704
        %v709 = vadd.f32 %v650, %v705
        %v710 = vadd.f32 %v651, %v706
        %v711 = vadd.f32 %v652, %v707
        %712 = vst [vmem:[%s234] sm:$0xff] %v708
        %713 = vst [vmem:[%s234 + $0x8] sm:$0xff] %v709
        %714 = vst [vmem:[%s234 + $0x10] sm:$0xff] %v710
        %715 = vst [vmem:[%s234 + $0x18] sm:$0xff] %v711
        %s716 = sand.u32 %s111, 1
        %s717 = scalar_lea.sflag [#allocation4], %s716
        %s718 = sand.u32 %s111, 1
        %s719 = smul.addr %s718, 32
        %s720 = scalar_lea.vmem [#allocation7], %s719
        // Predicated region
        $region37: #{tpu_custom_call.1} parent=27 // pred_check
          %p721 = pneg %p121
        $region38: #{tpu_custom_call.1} parent=27 // pred_check_branch
          %723 = sbr.rel (%p721) target = $region40
        $region39: #{tpu_custom_call.1} parent=27 // pred_region
          %s724 = smul.u32 4, %s29
          %s726 = ssub.s32 512, 512
          %727 = vsyncadd %s717, %s726
          %s728 = sadd.s32 %s28, %s724
          %s729 = smul.addr %s27, 4
          %s730 = sadd.s32 %s728, %s729
          %s731 = smul.addr %s730, 128
          %s732 = scalar_lea.hbm %s2, %s731
          %s733 = sshll.u32 %s720, 4
          %s734 = int_to_ptr.vmem [resolvable:$true] %s733
          %739 = dma.vmem_to_hbm [thread:$0]  %s734, 512, %s732, %s717, 128, 128, 8
        $region40: #{tpu_custom_call.1} parent=27 // pred_fallthru
          _
      $region28: #{tpu_custom_call.1} parent=5 // pred_fallthru
        _
      %p740 = scmp.le.s32.totalorder 2, %s17
      // Predicated region
      $region41: #{tpu_custom_call.1} parent=5 // pred_check
        %p741 = pneg %p740
      $region42: #{tpu_custom_call.1} parent=5 // pred_check_branch
        %743 = sbr.rel (%p741) target = $region44
      $region43: #{tpu_custom_call.1} parent=5 // pred_region
        %s744 = ssub.s32 %s17, 2
        // Predicated region
        $region45: #{tpu_custom_call.1} parent=43 // pred_check
          %p745 = pneg %p127
        $region46: #{tpu_custom_call.1} parent=43 // pred_check_branch
          %747 = sbr.rel (%p745) target = $region48
        $region47: #{tpu_custom_call.1} parent=43 // pred_region
          %s748 = sand.u32 %s112, 1
          %s749 = scalar_lea.sflag [#allocation4], %s748
          %s750 = sand.u32 %s112, 1
          %s751 = smul.addr %s750, 32
          %s752 = scalar_lea.vmem [#allocation7], %s751
          %753 = dma.done %s749, 512
        $region48: #{tpu_custom_call.1} parent=43 // pred_fallthru
          _
      $region44: #{tpu_custom_call.1} parent=5 // pred_fallthru
        _
    $region6: #{tpu_custom_call.1} parent=1 // loop_footer
      %s21 = sadd.s32 1, %s17
    $region7: #{tpu_custom_call.1} parent=1 // loop_footer_branch
      %16 = sbr.rel target = $region3
    $region8: #{tpu_custom_call.1} parent=1 // loop_exit
      _
    %754 = vsyncpa [#allocation3], 1
    %s755 = scalar_lea.sflag [#allocation3], 1
    %756 = vsyncpa %s755, 1
    %757 = vsyncpa [#allocation6], 1
    %s758 = scalar_lea.sflag [#allocation6], 1
    %759 = vsyncpa %s758, 1
    %760 = vsyncpa [#allocation4], 1
    %s761 = scalar_lea.sflag [#allocation4], 1
    %762 = vsyncpa %s761, 1

</llo_original>
